<compile_context>
chip_gen: v6e
topology: v6e:2x2x1
jax: 0.10.0
libtpu: 0.0.40
codegen_flags: <defaults>
</compile_context>

<pallas_src>
import math
import functools

import jax
import jax.numpy as jnp
from jax.experimental import pallas as pl
from jax.experimental.pallas import tpu as pltpu


def _spherefacer_s_kernel(x_ref, w_ref, inv_wn_ref, y_ref, loss_ref, *, m, s, t, lw_over_s):
    x = x_ref[...]            # (bm, D) f32
    w = w_ref[...]            # (D, C)  f32 (raw, un-normalized weights)
    inv_wn = inv_wn_ref[...]  # (1, C)  f32: 1 / ||w[:, c]||  (hoisted, computed once)
    y = y_ref[...]            # (bm, 1) int32

    # magnitude = ||x||_2 per row  (rsqrt + multiply; no divide anywhere)
    sumsq = jnp.maximum(jnp.sum(x * x, axis=1, keepdims=True), 1e-12)   # (bm, 1)
    inv_mag = jax.lax.rsqrt(sumsq)                                      # 1 / ||x||
    mag = sumsq * inv_mag                                               # == ||x||

    # cos_theta = x.mm(F.normalize(w, 2, 0)) / ||x||  without materializing w_n
    xw = jnp.dot(x, w, preferred_element_type=jnp.float32)              # (bm, C) MXU
    cos_theta = xw * inv_wn * inv_mag
    cc = jnp.clip(cos_theta, -1.0 + 1e-5, 1.0 - 1e-5)

    bm, num_class = cos_theta.shape
    col_ids = jax.lax.broadcasted_iota(jnp.int32, (bm, num_class), 1)
    is_target = col_ids == y                                            # one-hot rows

    # ---- get_d_theta, magn_type == 'v0' ----
    # logits = mag * (cos_theta + d_theta) = mag * phi_theta  (d_theta = phi - cos)
    if m == 1.0:
        # steps=[] => m = 1 on every forward: theta = acos(cc) lies in (0, pi), so
        # k = 0, sign = +1 and phi_theta = cos(acos(cc)) = cc.  Logits collapse.
        logits = mag * cc
    else:
        theta = jnp.arccos(cc)
        m_theta = jnp.where(is_target, theta * m, theta)   # scatter_(1, y, m, 'multiply')
        # k >= 0 always (theta in (0, pi), m > 0), so k - 2*floor(k/2) == k mod 2.
        k = jnp.floor(m_theta * (1.0 / math.pi))
        sign = 1.0 - 2.0 * (k - 2.0 * jnp.floor(k * 0.5))
        phi_theta = sign * jnp.cos(m_theta) - 2.0 * k
        logits = mag * phi_theta

    # cross entropy per row: logsumexp(logits) - logits[target]
    row_max = jnp.max(logits, axis=1, keepdims=True)
    lse = row_max + jnp.log(jnp.sum(jnp.exp(logits - row_max), axis=1, keepdims=True))
    tgt = jnp.sum(jnp.where(is_target, logits, 0.0), axis=1, keepdims=True)
    ce = lse - tgt                                                      # (bm, 1)

    # Per-row loss reduced to one scalar per tile; dividing the summed partials by B
    # outside reproduces  lw * CE.mean() / s + (t * |mag - s|).mean().
    row_loss = lw_over_s * ce + t * jnp.abs(mag - s)                    # (bm, 1)
    loss_ref[...] = jnp.sum(row_loss, axis=0, keepdims=True)            # (1, 1)


def spherefacer_s_loss(x, w, y, *, m=1.0, s=30.0, t=0.01, lw=50.0, bm=None):
    B, D = x.shape
    Dw, C = w.shape
    assert D == Dw

    if bm is None:
        # Single grid step for small batches; cap the tile at 256 rows (fills the
        # 256-wide MXU M dimension on v6e/v7x) once the batch grows.
        bm = B if B <= 256 else 256
    assert B % bm == 0, (B, bm)
    num_tiles = B // bm

    x = x.astype(jnp.float32)
    w = w.astype(jnp.float32)
    y2 = y.astype(jnp.int32).reshape(B, 1)
    # Hoisted weight column-norm: (1, C) inverse norm computed once, outside the grid.
    inv_wn = jax.lax.rsqrt(jnp.maximum(jnp.sum(w * w, axis=0, keepdims=True), 1e-12))

    kernel = functools.partial(_spherefacer_s_kernel, m=float(m), s=float(s),
                               t=float(t), lw_over_s=float(lw) / float(s))

    # Note: for large C on v7x (64 MiB VMEM), give the constant w block
    # pipeline_mode=pl.Buffered(1) or switch to a class-tiled online-LSE grid.
    partial_sums = pl.pallas_call(
        kernel,
        out_shape=jax.ShapeDtypeStruct((num_tiles, 1, 1), jnp.float32),
        grid_spec=pltpu.PrefetchScalarGridSpec(
            num_scalar_prefetch=0,
            grid=(num_tiles,),
            in_specs=[
                pl.BlockSpec((bm, D), lambda i: (i, 0)),   # x tile
                pl.BlockSpec((D, C), lambda i: (0, 0)),    # full raw weight, resident
                pl.BlockSpec((1, C), lambda i: (0, 0)),    # 1/||w_col|| scale
                pl.BlockSpec((bm, 1), lambda i: (i, 0)),   # labels tile
            ],
            out_specs=pl.BlockSpec((None, 1, 1), lambda i: (i, 0, 0)),
        ),
        compiler_params=pltpu.CompilerParams(
            dimension_semantics=("parallel",)),
    )(x, w, inv_wn, y2)

    return jnp.sum(partial_sums) / B


def _reference_loss(x, w, y, *, m=1.0, s=30.0, t=0.01, lw=50.0):
    # Pure-JAX mirror of the PyTorch forward (magn_type='v0'), full trig path.
    w_n = w / jnp.linalg.norm(w, axis=0, keepdims=True)
    mag = jnp.linalg.norm(x, axis=1, keepdims=True)
    cos_theta = (x @ w_n) / mag
    m_theta = jnp.arccos(jnp.clip(cos_theta, -1.0 + 1e-5, 1.0 - 1e-5))
    one_hot = jax.nn.one_hot(y, w.shape[1], dtype=cos_theta.dtype)
    m_theta = jnp.where(one_hot > 0, m_theta * m, m_theta)
    k = jnp.floor(m_theta / math.pi)
    sign = -2.0 * jnp.mod(k, 2.0) + 1.0
    phi_theta = sign * jnp.cos(m_theta) - 2.0 * k
    d_theta = phi_theta - cos_theta
    logits = mag * (cos_theta + d_theta)
    lse = jax.scipy.special.logsumexp(logits, axis=1)
    tgt = jnp.take_along_axis(logits, y[:, None], axis=1)[:, 0]
    loss = lw * jnp.mean(lse - tgt) / s
    loss = loss + jnp.mean(t * jnp.abs(mag - s))
    return loss


if __name__ == "__main__":
    # Module config: feat_dim=32, num_class=128, magn_type='v0', s=30, dm=1.5,
    # steps=[] (=> m = 1.0 on every forward), t=0.01, lw=50.
    B, feat_dim, num_class = 64, 32, 128

    key = jax.random.PRNGKey(0)
    kx, kw, ky = jax.random.split(key, 3)
    x = jax.random.normal(kx, (B, feat_dim), jnp.float32) * 4.0
    # xavier_normal_ for (feat_dim, num_class): std = sqrt(2 / (fan_in + fan_out))
    std = math.sqrt(2.0 / (feat_dim + num_class))
    w = jax.random.normal(kw, (feat_dim, num_class), jnp.float32) * std
    y = jax.random.randint(ky, (B,), 0, num_class, jnp.int32)

    loss_fn = jax.jit(lambda x_, w_, y_: spherefacer_s_loss(
        x_, w_, y_, m=1.0, s=30.0, t=0.01, lw=50.0))
    loss = loss_fn(x, w, y)
    jax.block_until_ready(loss)

    ref = _reference_loss(x, w, y, m=1.0, s=30.0, t=0.01, lw=50.0)
    assert jnp.isfinite(loss), loss
    assert jnp.allclose(loss, ref, rtol=2e-3, atol=2e-3), (float(loss), float(ref))

    print("KERNEL_OK")
</pallas_src>

<mosaic_0001>
module attributes {stable_mosaic.version = 11 : i64} {
  func.func @_spherefacer_s_kernel(%arg0: i32, %arg1: memref<64x32xf32, #tpu.memory_space<vmem>>, %arg2: memref<32x128xf32, #tpu.memory_space<vmem>>, %arg3: memref<1x128xf32, #tpu.memory_space<vmem>>, %arg4: memref<64x1xi32, #tpu.memory_space<vmem>>, %arg5: memref<1x1x1xf32, #tpu.memory_space<vmem>>) attributes {dimension_semantics = [#tpu.dimension_semantics<parallel>], iteration_bounds = array<i64: 1>, scalar_prefetch = 0 : i64, scratch_operands = 0 : i64, tpu.core_type = #tpu.core_type<tc>, window_params = [{transform_indices = @transform_0, window_bounds = array<i64: 64, 32>}, {pipeline_mode = #tpu.pipeline_mode<synchronous>, transform_indices = @transform_1, window_bounds = array<i64: 32, 128>}, {pipeline_mode = #tpu.pipeline_mode<synchronous>, transform_indices = @transform_2, window_bounds = array<i64: 1, 128>}, {transform_indices = @transform_3, window_bounds = array<i64: 64, 1>}, {transform_indices = @transform_4, window_bounds = array<i64: 1, 1, 1>}]} {
    %c0 = arith.constant 0 : index
    %c0_0 = arith.constant 0 : index
    %0 = vector.load %arg1[%c0, %c0_0] : memref<64x32xf32, #tpu.memory_space<vmem>>, vector<64x32xf32>
    %c0_1 = arith.constant 0 : index
    %c0_2 = arith.constant 0 : index
    %1 = vector.load %arg2[%c0_1, %c0_2] : memref<32x128xf32, #tpu.memory_space<vmem>>, vector<32x128xf32>
    %c0_3 = arith.constant 0 : index
    %c0_4 = arith.constant 0 : index
    %2 = vector.load %arg3[%c0_3, %c0_4] : memref<1x128xf32, #tpu.memory_space<vmem>>, vector<1x128xf32>
    %c0_5 = arith.constant 0 : index
    %c0_6 = arith.constant 0 : index
    %3 = vector.load %arg4[%c0_5, %c0_6] : memref<64x1xi32, #tpu.memory_space<vmem>>, vector<64x1xi32>
    %4 = arith.mulf %0, %0 : vector<64x32xf32>
    %cst = arith.constant dense<0.000000e+00> : vector<64xf32>
    %5 = vector.multi_reduction <add>, %4, %cst [1] : vector<64x32xf32> to vector<64xf32>
    %6 = vector.shape_cast %5 : vector<64xf32> to vector<64x1xf32>
    %cst_7 = arith.constant 9.99999996E-13 : f32
    %7 = vector.broadcast %cst_7 : f32 to vector<64x1xf32>
    %8 = arith.maximumf %6, %7 : vector<64x1xf32>
    %9 = math.rsqrt %8 : vector<64x1xf32>
    %10 = arith.mulf %8, %9 : vector<64x1xf32>
    %cst_8 = arith.constant dense<0.000000e+00> : vector<64x128xf32>
    %11 = tpu.matmul %0, %1, %cst_8 {dimension_numbers = #tpu.dot_dimension_numbers<[1], [0], [0], [1], [0, 0, 1, 1], [], []>} : vector<64x32xf32>, vector<32x128xf32>, vector<64x128xf32> -> vector<64x128xf32>
    %12 = vector.broadcast %2 : vector<1x128xf32> to vector<64x128xf32>
    %13 = arith.mulf %11, %12 : vector<64x128xf32>
    %14 = vector.broadcast %9 : vector<64x1xf32> to vector<64x128xf32>
    %15 = arith.mulf %13, %14 : vector<64x128xf32>
    %cst_9 = arith.constant -0.999989986 : f32
    %cst_10 = arith.constant 0.999989986 : f32
    %16 = vector.broadcast %cst_9 : f32 to vector<64x128xf32>
    %17 = arith.maximumf %16, %15 : vector<64x128xf32>
    %18 = vector.broadcast %cst_10 : f32 to vector<64x128xf32>
    %19 = arith.minimumf %18, %17 : vector<64x128xf32>
    %20 = tpu.iota {dimensions = array<i32: 1>} : vector<64x128xi32>
    %21 = vector.broadcast %3 : vector<64x1xi32> to vector<64x128xi32>
    %22 = arith.cmpi eq, %20, %21 : vector<64x128xi32>
    %23 = vector.broadcast %10 : vector<64x1xf32> to vector<64x128xf32>
    %24 = arith.mulf %23, %19 : vector<64x128xf32>
    %cst_11 = arith.constant dense<0xFF800000> : vector<64xf32>
    %25 = vector.multi_reduction <maximumf>, %24, %cst_11 [1] : vector<64x128xf32> to vector<64xf32>
    %26 = vector.shape_cast %25 : vector<64xf32> to vector<64x1xf32>
    %27 = vector.broadcast %26 : vector<64x1xf32> to vector<64x128xf32>
    %28 = arith.subf %24, %27 : vector<64x128xf32>
    %29 = math.exp %28 : vector<64x128xf32>
    %cst_12 = arith.constant dense<0.000000e+00> : vector<64xf32>
    %30 = vector.multi_reduction <add>, %29, %cst_12 [1] : vector<64x128xf32> to vector<64xf32>
    %31 = vector.shape_cast %30 : vector<64xf32> to vector<64x1xf32>
    %32 = math.log %31 : vector<64x1xf32>
    %33 = arith.addf %26, %32 : vector<64x1xf32>
    %cst_13 = arith.constant 0.000000e+00 : f32
    %34 = vector.broadcast %cst_13 : f32 to vector<64x128xf32>
    %35 = arith.select %22, %24, %34 : vector<64x128xi1>, vector<64x128xf32>
    %cst_14 = arith.constant dense<0.000000e+00> : vector<64xf32>
    %36 = vector.multi_reduction <add>, %35, %cst_14 [1] : vector<64x128xf32> to vector<64xf32>
    %37 = vector.shape_cast %36 : vector<64xf32> to vector<64x1xf32>
    %38 = arith.subf %33, %37 : vector<64x1xf32>
    %cst_15 = arith.constant 1.66666663 : f32
    %39 = vector.broadcast %cst_15 : f32 to vector<64x1xf32>
    %40 = arith.mulf %39, %38 : vector<64x1xf32>
    %cst_16 = arith.constant 3.000000e+01 : f32
    %41 = vector.broadcast %cst_16 : f32 to vector<64x1xf32>
    %42 = arith.subf %10, %41 : vector<64x1xf32>
    %43 = math.absf %42 : vector<64x1xf32>
    %cst_17 = arith.constant 0.00999999977 : f32
    %44 = vector.broadcast %cst_17 : f32 to vector<64x1xf32>
    %45 = arith.mulf %44, %43 : vector<64x1xf32>
    %46 = arith.addf %40, %45 : vector<64x1xf32>
    %cst_18 = arith.constant dense<0.000000e+00> : vector<1xf32>
    %47 = vector.multi_reduction <add>, %46, %cst_18 [0] : vector<64x1xf32> to vector<1xf32>
    %48 = vector.shape_cast %47 : vector<1xf32> to vector<1x1xf32>
    %c0_19 = arith.constant 0 : index
    %c0_20 = arith.constant 0 : index
    %c0_21 = arith.constant 0 : index
    %49 = vector.load %arg5[%c0_19, %c0_20, %c0_21] : memref<1x1x1xf32, #tpu.memory_space<vmem>>, vector<1x1x1xf32>
    %50 = vector.shape_cast %49 : vector<1x1x1xf32> to vector<1x1xf32>
    %51 = vector.shape_cast %48 : vector<1x1xf32> to vector<1x1x1xf32>
    tpu.vector_store %arg5[%c0_19, %c0_20, %c0_21], %51 {strides = array<i32>} : memref<1x1x1xf32, #tpu.memory_space<vmem>>, vector<1x1x1xf32>,
    return
  }
  func.func @transform_0(%arg0: i32) -> (i32, i32) {
    %c0_i32 = arith.constant 0 : i32
    %c0_i32_0 = arith.constant 0 : i32
    return %arg0, %c0_i32 : i32, i32
  }
  func.func @transform_1(%arg0: i32) -> (i32, i32) {
    %c0_i32 = arith.constant 0 : i32
    %c0_i32_0 = arith.constant 0 : i32
    %c0_i32_1 = arith.constant 0 : i32
    return %c0_i32, %c0_i32_0 : i32, i32
  }
  func.func @transform_2(%arg0: i32) -> (i32, i32) {
    %c0_i32 = arith.constant 0 : i32
    %c0_i32_0 = arith.constant 0 : i32
    %c0_i32_1 = arith.constant 0 : i32
    return %c0_i32, %c0_i32_0 : i32, i32
  }
  func.func @transform_3(%arg0: i32) -> (i32, i32) {
    %c0_i32 = arith.constant 0 : i32
    %c0_i32_0 = arith.constant 0 : i32
    return %arg0, %c0_i32 : i32, i32
  }
  func.func @transform_4(%arg0: i32) -> (i32, i32, i32) {
    %c0_i32 = arith.constant 0 : i32
    %c0_i32_0 = arith.constant 0 : i32
    %c0_i32_1 = arith.constant 0 : i32
    return %arg0, %c0_i32, %c0_i32_0 : i32, i32, i32
  }
}

</mosaic_0001>

<llo_original>
// kernel: _lambda_.1
$region0: #{_lambda_.1}
  #allocation0 [shape = 'u32[]', space=smem, size = 0x4, offset = 0x4, fixed_abs, tag = 'smem constant byte address 0x4 - core index']
  #allocation1 [shape = 'u32[144,128]{1,0:T(1,128)}', space=vmem, size = 0x12000, scoped, tag = 'internal scratch']
  %s0 = inlined_call_operand.vmem [shape: f32[64,32], index: 0, kind: input, shape index: {}]
  %s1 = inlined_call_operand.vmem [shape: f32[32,128], index: 1, kind: input, shape index: {}]
  %s2 = inlined_call_operand.vmem [shape: f32[1,128], index: 2, kind: input, shape index: {}]
  %s3 = inlined_call_operand.vmem [shape: s32[64,1], index: 3, kind: input, shape index: {}]
  %s4 = inlined_call_operand.hbm [shape: f32[1,1,1], index: 4, kind: output, shape index: {}]
  %s5 = sld [smem:[#allocation0]]
  $region26: #{_lambda_.1} parent=0
    _
  %s7 = ssub.s32 1, %s5
  %s8 = scalar_select 0, %s7, %s5
  $region1: #{_lambda_.1} parent=0
    #allocation2 [shape = 'u8[512]{0}', space=vmem, size = 0x400, scoped, tag = 'output window, operand 0, single buffered']
    #allocation3 [shape = 's32[1]{0}', space=sflag, size = 0x4, scoped, tag = 'scoped memory for _lambda_.1']
    %9 = vsyncpa [#allocation3], 0
    // Predicated region
    $region2: #{_lambda_.1} parent=1 // pred_check
      _
    $region3: #{_lambda_.1} parent=1 // pred_check_branch
      %11 = sbr.rel (0) target = $region5
    $region4: #{_lambda_.1} parent=1 // pred_region
      _
    $region5: #{_lambda_.1} parent=1 // pred_fallthru
      _
    // Predicated region
    $region6: #{_lambda_.1} parent=1 // pred_check
      _
    $region7: #{_lambda_.1} parent=1 // pred_check_branch
      %13 = sbr.rel (0) target = $region9
    $region8: #{_lambda_.1} parent=1 // pred_region
      _
    $region9: #{_lambda_.1} parent=1 // pred_fallthru
      _
    // Predicated region
    $region10: #{_lambda_.1} parent=1 // pred_check
      _
    $region11: #{_lambda_.1} parent=1 // pred_check_branch
      %15 = sbr.rel (0) target = $region13
    $region12: #{_lambda_.1} parent=1 // pred_region
      _
    $region13: #{_lambda_.1} parent=1 // pred_fallthru
      _
    // Predicated region
    $region14: #{_lambda_.1} parent=1 // pred_check
      _
    $region15: #{_lambda_.1} parent=1 // pred_check_branch
      %17 = sbr.rel (0) target = $region17
    $region16: #{_lambda_.1} parent=1 // pred_region
      _
    $region17: #{_lambda_.1} parent=1 // pred_fallthru
      _
    %v18 = vld [vmem:[%s0] sm:$0xff]
    %v19 = vld [vmem:[%s0 + $0x8] sm:$0xff]
    %v20 = vld [vmem:[%s0 + $0x10] sm:$0xff]
    %v21 = vld [vmem:[%s0 + $0x18] sm:$0xff]
    %v22 = vld [vmem:[%s0 + $0x20] sm:$0xff]
    %v23 = vld [vmem:[%s0 + $0x28] sm:$0xff]
    %v24 = vld [vmem:[%s0 + $0x30] sm:$0xff]
    %v25 = vld [vmem:[%s0 + $0x38] sm:$0xff]
    %v26 = vld [vmem:[%s1] sm:$0xff]
    %v27 = vld [vmem:[%s1 + $0x8] sm:$0xff]
    %v28 = vld [vmem:[%s1 + $0x10] sm:$0xff]
    %v29 = vld [vmem:[%s1 + $0x18] sm:$0xff]
    %v30 = vld [vmem:[%s2] sm:$0x1]
    %v31 = vld [vmem:[%s3] sm:$0xff]
    %v32 = vld [vmem:[%s3 + $0x8] sm:$0xff]
    %v33 = vld [vmem:[%s3 + $0x10] sm:$0xff]
    %v34 = vld [vmem:[%s3 + $0x18] sm:$0xff]
    %v35 = vld [vmem:[%s3 + $0x20] sm:$0xff]
    %v36 = vld [vmem:[%s3 + $0x28] sm:$0xff]
    %v37 = vld [vmem:[%s3 + $0x30] sm:$0xff]
    %v38 = vld [vmem:[%s3 + $0x38] sm:$0xff]
    %v39 = vmul.f32 %v18, %v18
    %v40 = vmul.f32 %v19, %v19
    %v41 = vmul.f32 %v20, %v20
    %v42 = vmul.f32 %v21, %v21
    %v43 = vmul.f32 %v22, %v22
    %v44 = vmul.f32 %v23, %v23
    %v45 = vmul.f32 %v24, %v24
    %v46 = vmul.f32 %v25, %v25
    %vm47 = vcmask 261120
    %v48 = vsel %vm47, %v39, 0.0
    %49 = vadd.xlane.f32.xlu0 %v48
    %v50 = vpop.xlane.xlu0 %49
    %v51 = vsel %vm47, %v40, 0.0
    %52 = vadd.xlane.f32.xlu0 %v51
    %v53 = vpop.xlane.xlu0 %52
    %v54 = vsel %vm47, %v41, 0.0
    %55 = vadd.xlane.f32.xlu0 %v54
    %v56 = vpop.xlane.xlu0 %55
    %v57 = vsel %vm47, %v42, 0.0
    %58 = vadd.xlane.f32.xlu0 %v57
    %v59 = vpop.xlane.xlu0 %58
    %v60 = vsel %vm47, %v43, 0.0
    %61 = vadd.xlane.f32.xlu0 %v60
    %v62 = vpop.xlane.xlu0 %61
    %v63 = vsel %vm47, %v44, 0.0
    %64 = vadd.xlane.f32.xlu0 %v63
    %v65 = vpop.xlane.xlu0 %64
    %v66 = vsel %vm47, %v45, 0.0
    %67 = vadd.xlane.f32.xlu0 %v66
    %v68 = vpop.xlane.xlu0 %67
    %v69 = vsel %vm47, %v46, 0.0
    %70 = vadd.xlane.f32.xlu0 %v69
    %v71 = vpop.xlane.xlu0 %70
    %v72 = vmax.f32 %v50, 1e-12
    %v73 = vmax.f32 %v53, 1e-12
    %v74 = vmax.f32 %v56, 1e-12
    %v75 = vmax.f32 %v59, 1e-12
    %v76 = vmax.f32 %v62, 1e-12
    %v77 = vmax.f32 %v65, 1e-12
    %v78 = vmax.f32 %v68, 1e-12
    %v79 = vmax.f32 %v71, 1e-12
    %v80 = vrsqrt.pop %v72
    %v81 = vrsqrt.pop %v73
    %v82 = vrsqrt.pop %v74
    %v83 = vrsqrt.pop %v75
    %v84 = vrsqrt.pop %v76
    %v85 = vrsqrt.pop %v77
    %v86 = vrsqrt.pop %v78
    %v87 = vrsqrt.pop %v79
    %v88 = vmul.f32 %v72, %v80
    %v89 = vmul.f32 %v73, %v81
    %v90 = vmul.f32 %v74, %v82
    %v91 = vmul.f32 %v75, %v83
    %v92 = vmul.f32 %v76, %v84
    %v93 = vmul.f32 %v77, %v85
    %v94 = vmul.f32 %v78, %v86
    %v95 = vmul.f32 %v79, %v87
    %v97 = vsel %vm47, %v18, 0
    %v100 = vsel %vm47, %v19, 0
    %v103 = vsel %vm47, %v20, 0
    %v106 = vsel %vm47, %v21, 0
    %v109 = vsel %vm47, %v22, 0
    %v112 = vsel %vm47, %v23, 0
    %v115 = vsel %vm47, %v24, 0
    %v118 = vsel %vm47, %v25, 0
    %120 = vmatprep.subr.mxu0 0.0
    %121 = vmatpush1.msra.mxu0 0.0
    %122 = vmatprep.subr.mxu0 0.0
    %123 = vmatpush1.msra.mxu0 0.0
    %124 = vmatprep.subr.mxu0 0.0
    %125 = vmatpush1.msra.mxu0 0.0
    %126 = vmatprep.subr.mxu0 0.0
    %127 = vmatpush1.msra.mxu0 0.0
    %128 = vmatprep.subr.mxu0 0.0
    %129 = vmatpush1.msra.mxu0 0.0
    %130 = vmatprep.subr.mxu0 0.0
    %131 = vmatpush1.msra.mxu0 0.0
    %132 = vmatprep.subr.mxu0 0.0
    %133 = vmatpush1.msra.mxu0 0.0
    %134 = vmatprep.subr.mxu0 0.0
    %135 = vmatpush1.msra.mxu0 0.0
    %136 = vmatprep.subr.mxu0 0.0
    %137 = vmatpush1.msra.mxu0 0.0
    %138 = vmatprep.subr.mxu0 0.0
    %139 = vmatpush1.msra.mxu0 0.0
    %140 = vmatprep.subr.mxu0 0.0
    %141 = vmatpush1.msra.mxu0 0.0
    %142 = vmatprep.subr.mxu0 0.0
    %143 = vmatpush1.msra.mxu0 0.0
    %144 = vmatprep.subr.mxu0 0.0
    %145 = vmatpush1.msra.mxu0 %v29
    %146 = vmatprep.subr.mxu0 0.0
    %147 = vmatpush1.msra.mxu0 %v28
    %148 = vmatprep.subr.mxu0 0.0
    %149 = vmatpush1.msra.mxu0 %v27
    %150 = vmatprep.subr.mxu0 0.0
    %151 = vmatpush1.msra.mxu0 %v26
    %152 = vmatprep.subr.mxu0 0.0
    %153 = vmatpush2.msra.mxu0 0.0
    %154 = vmatprep.subr.mxu0 0.0
    %155 = vmatpush2.msra.mxu0 0.0
    %156 = vmatprep.subr.mxu0 0.0
    %157 = vmatpush2.msra.mxu0 0.0
    %158 = vmatprep.subr.mxu0 0.0
    %159 = vmatpush2.msra.mxu0 0.0
    %160 = vmatprep.subr.mxu0 0.0
    %161 = vmatpush2.msra.mxu0 0.0
    %162 = vmatprep.subr.mxu0 0.0
    %163 = vmatpush2.msra.mxu0 0.0
    %164 = vmatprep.subr.mxu0 0.0
    %165 = vmatpush2.msra.mxu0 0.0
    %166 = vmatprep.subr.mxu0 0.0
    %167 = vmatpush2.msra.mxu0 0.0
    %168 = vmatprep.subr.mxu0 0.0
    %169 = vmatpush2.msra.mxu0 0.0
    %170 = vmatprep.subr.mxu0 0.0
    %171 = vmatpush2.msra.mxu0 0.0
    %172 = vmatprep.subr.mxu0 0.0
    %173 = vmatpush2.msra.mxu0 0.0
    %174 = vmatprep.subr.mxu0 0.0
    %175 = vmatpush2.msra.mxu0 0.0
    %176 = vmatprep.subr.mxu0 0.0
    %177 = vmatpush2.msra.mxu0 0.0
    %178 = vmatprep.subr.mxu0 0.0
    %179 = vmatpush2.msra.mxu0 0.0
    %180 = vmatprep.subr.mxu0 0.0
    %181 = vmatpush2.msra.mxu0 0.0
    %182 = vmatprep.subr.mxu0 0.0
    %183 = vmatpush2.msra.mxu0 0.0
    %184 = vmatprep.mubr.f32.mxu0 0.0
    %185 = vmatmul.mubr.f32.gmra.mxu0 %v97
    %v186 = vpop.f32.mrf.mxu0
    %v187 = vadd.f32 0.0, %v186
    %v188 = vpop.f32.mrf.mxu0
    %189 = vmatprep.mubr.f32.mxu0 0.0
    %190 = vmatmul.mubr.f32.gmra.mxu0 %v100
    %v191 = vpop.f32.mrf.mxu0
    %v192 = vadd.f32 0.0, %v191
    %v193 = vpop.f32.mrf.mxu0
    %194 = vmatprep.mubr.f32.mxu0 0.0
    %195 = vmatmul.mubr.f32.gmra.mxu0 %v103
    %v196 = vpop.f32.mrf.mxu0
    %v197 = vadd.f32 0.0, %v196
    %v198 = vpop.f32.mrf.mxu0
    %199 = vmatprep.mubr.f32.mxu0 0.0
    %200 = vmatmul.mubr.f32.gmra.mxu0 %v106
    %v201 = vpop.f32.mrf.mxu0
    %v202 = vadd.f32 0.0, %v201
    %v203 = vpop.f32.mrf.mxu0
    %204 = vmatprep.mubr.f32.mxu0 0.0
    %205 = vmatmul.mubr.f32.gmra.mxu0 %v109
    %v206 = vpop.f32.mrf.mxu0
    %v207 = vadd.f32 0.0, %v206
    %v208 = vpop.f32.mrf.mxu0
    %209 = vmatprep.mubr.f32.mxu0 0.0
    %210 = vmatmul.mubr.f32.gmra.mxu0 %v112
    %v211 = vpop.f32.mrf.mxu0
    %v212 = vadd.f32 0.0, %v211
    %v213 = vpop.f32.mrf.mxu0
    %214 = vmatprep.mubr.f32.mxu0 0.0
    %215 = vmatmul.mubr.f32.gmra.mxu0 %v115
    %v216 = vpop.f32.mrf.mxu0
    %v217 = vadd.f32 0.0, %v216
    %v218 = vpop.f32.mrf.mxu0
    %219 = vmatprep.mubr.f32.mxu0 0.0
    %220 = vmatmul.mubr.f32.gmra.mxu0 %v118
    %v221 = vpop.f32.mrf.mxu0
    %v222 = vadd.f32 0.0, %v221
    %v223 = vpop.f32.mrf.mxu0
    %224 = vdwg.mxu0
    %v226 = vlaneseq
    %v227 = vshrl.u32 %v226, 7
    %v228 = vsub.s32 0, %v227
    %v229 = vrot.slane %v30, %v228
    %v231 = vmul.f32 %v187, %v229
    %v232 = vmul.f32 %v192, %v229
    %v233 = vmul.f32 %v197, %v229
    %v234 = vmul.f32 %v202, %v229
    %v235 = vmul.f32 %v207, %v229
    %v236 = vmul.f32 %v212, %v229
    %v237 = vmul.f32 %v217, %v229
    %v238 = vmul.f32 %v222, %v229
    %v239 = vmul.f32 %v231, %v80
    %v240 = vmul.f32 %v232, %v81
    %v241 = vmul.f32 %v233, %v82
    %v242 = vmul.f32 %v234, %v83
    %v243 = vmul.f32 %v235, %v84
    %v244 = vmul.f32 %v236, %v85
    %v245 = vmul.f32 %v237, %v86
    %v246 = vmul.f32 %v238, %v87
    %v247 = vmax.f32 %v239, -0.99999
    %v248 = vmax.f32 %v240, -0.99999
    %v249 = vmax.f32 %v241, -0.99999
    %v250 = vmax.f32 %v242, -0.99999
    %v251 = vmax.f32 %v243, -0.99999
    %v252 = vmax.f32 %v244, -0.99999
    %v253 = vmax.f32 %v245, -0.99999
    %v254 = vmax.f32 %v246, -0.99999
    %v255 = vmin.f32 %v247, 0.99999
    %v256 = vmin.f32 %v248, 0.99999
    %v257 = vmin.f32 %v249, 0.99999
    %v258 = vmin.f32 %v250, 0.99999
    %v259 = vmin.f32 %v251, 0.99999
    %v260 = vmin.f32 %v252, 0.99999
    %v261 = vmin.f32 %v253, 0.99999
    %v262 = vmin.f32 %v254, 0.99999
    %v263 = vlaneseq
    %v264 = vand.u32 %v263, 127
    %265 = vset.pattern.permute.xlu0 0
    %266 = vperm.xlu0 %265, %v31
    %v267 = vpop.permute.xlu0 %266
    %268 = vset.pattern.permute.xlu0 0
    %269 = vperm.xlu0 %268, %v32
    %v270 = vpop.permute.xlu0 %269
    %271 = vset.pattern.permute.xlu0 0
    %272 = vperm.xlu0 %271, %v33
    %v273 = vpop.permute.xlu0 %272
    %274 = vset.pattern.permute.xlu0 0
    %275 = vperm.xlu0 %274, %v34
    %v276 = vpop.permute.xlu0 %275
    %277 = vset.pattern.permute.xlu0 0
    %278 = vperm.xlu0 %277, %v35
    %v279 = vpop.permute.xlu0 %278
    %280 = vset.pattern.permute.xlu0 0
    %281 = vperm.xlu0 %280, %v36
    %v282 = vpop.permute.xlu0 %281
    %283 = vset.pattern.permute.xlu0 0
    %284 = vperm.xlu0 %283, %v37
    %v285 = vpop.permute.xlu0 %284
    %286 = vset.pattern.permute.xlu0 0
    %287 = vperm.xlu0 %286, %v38
    %v288 = vpop.permute.xlu0 %287
    %vm289 = vcmp.eq.s32.totalorder %v264, %v267
    %vm290 = vcmp.eq.s32.totalorder %v264, %v270
    %vm291 = vcmp.eq.s32.totalorder %v264, %v273
    %vm292 = vcmp.eq.s32.totalorder %v264, %v276
    %vm293 = vcmp.eq.s32.totalorder %v264, %v279
    %vm294 = vcmp.eq.s32.totalorder %v264, %v282
    %vm295 = vcmp.eq.s32.totalorder %v264, %v285
    %vm296 = vcmp.eq.s32.totalorder %v264, %v288
    %v297 = vmul.f32 %v88, %v255
    %v298 = vmul.f32 %v89, %v256
    %v299 = vmul.f32 %v90, %v257
    %v300 = vmul.f32 %v91, %v258
    %v301 = vmul.f32 %v92, %v259
    %v302 = vmul.f32 %v93, %v260
    %v303 = vmul.f32 %v94, %v261
    %v304 = vmul.f32 %v95, %v262
    %305 = vmax.xlane.f32.xlu0 %v297
    %v306 = vpop.xlane.xlu0 %305
    %307 = vmax.xlane.f32.xlu0 %v298
    %v308 = vpop.xlane.xlu0 %307
    %309 = vmax.xlane.f32.xlu0 %v299
    %v310 = vpop.xlane.xlu0 %309
    %311 = vmax.xlane.f32.xlu0 %v300
    %v312 = vpop.xlane.xlu0 %311
    %313 = vmax.xlane.f32.xlu0 %v301
    %v314 = vpop.xlane.xlu0 %313
    %315 = vmax.xlane.f32.xlu0 %v302
    %v316 = vpop.xlane.xlu0 %315
    %317 = vmax.xlane.f32.xlu0 %v303
    %v318 = vpop.xlane.xlu0 %317
    %319 = vmax.xlane.f32.xlu0 %v304
    %v320 = vpop.xlane.xlu0 %319
    %v321 = vsub.f32 %v297, %v306
    %v322 = vsub.f32 %v298, %v308
    %v323 = vsub.f32 %v299, %v310
    %v324 = vsub.f32 %v300, %v312
    %v325 = vsub.f32 %v301, %v314
    %v326 = vsub.f32 %v302, %v316
    %v327 = vsub.f32 %v303, %v318
    %v328 = vsub.f32 %v304, %v320
    %v329 = vmul.f32 %v321, 1.442695
    %v330 = vpow.pop %v329
    %v331 = vmul.f32 %v322, 1.442695
    %v332 = vpow.pop %v331
    %v333 = vmul.f32 %v323, 1.442695
    %v334 = vpow.pop %v333
    %v335 = vmul.f32 %v324, 1.442695
    %v336 = vpow.pop %v335
    %v337 = vmul.f32 %v325, 1.442695
    %v338 = vpow.pop %v337
    %v339 = vmul.f32 %v326, 1.442695
    %v340 = vpow.pop %v339
    %v341 = vmul.f32 %v327, 1.442695
    %v342 = vpow.pop %v341
    %v343 = vmul.f32 %v328, 1.442695
    %v344 = vpow.pop %v343
    %345 = vadd.xlane.f32.xlu0 %v330
    %v346 = vpop.xlane.xlu0 %345
    %347 = vadd.xlane.f32.xlu0 %v332
    %v348 = vpop.xlane.xlu0 %347
    %349 = vadd.xlane.f32.xlu0 %v334
    %v350 = vpop.xlane.xlu0 %349
    %351 = vadd.xlane.f32.xlu0 %v336
    %v352 = vpop.xlane.xlu0 %351
    %353 = vadd.xlane.f32.xlu0 %v338
    %v354 = vpop.xlane.xlu0 %353
    %355 = vadd.xlane.f32.xlu0 %v340
    %v356 = vpop.xlane.xlu0 %355
    %357 = vadd.xlane.f32.xlu0 %v342
    %v358 = vpop.xlane.xlu0 %357
    %359 = vadd.xlane.f32.xlu0 %v344
    %v360 = vpop.xlane.xlu0 %359
    %v361 = vlog2.pop %v346
    %v362 = vmul.f32 %v361, 0.6931472
    %v363 = vlog2.pop %v348
    %v364 = vmul.f32 %v363, 0.6931472
    %v365 = vlog2.pop %v350
    %v366 = vmul.f32 %v365, 0.6931472
    %v367 = vlog2.pop %v352
    %v368 = vmul.f32 %v367, 0.6931472
    %v369 = vlog2.pop %v354
    %v370 = vmul.f32 %v369, 0.6931472
    %v371 = vlog2.pop %v356
    %v372 = vmul.f32 %v371, 0.6931472
    %v373 = vlog2.pop %v358
    %v374 = vmul.f32 %v373, 0.6931472
    %v375 = vlog2.pop %v360
    %v376 = vmul.f32 %v375, 0.6931472
    %v377 = vadd.f32 %v306, %v362
    %v378 = vadd.f32 %v308, %v364
    %v379 = vadd.f32 %v310, %v366
    %v380 = vadd.f32 %v312, %v368
    %v381 = vadd.f32 %v314, %v370
    %v382 = vadd.f32 %v316, %v372
    %v383 = vadd.f32 %v318, %v374
    %v384 = vadd.f32 %v320, %v376
    %v385 = vsel %vm289, %v297, 0.0
    %v386 = vsel %vm290, %v298, 0.0
    %v387 = vsel %vm291, %v299, 0.0
    %v388 = vsel %vm292, %v300, 0.0
    %v389 = vsel %vm293, %v301, 0.0
    %v390 = vsel %vm294, %v302, 0.0
    %v391 = vsel %vm295, %v303, 0.0
    %v392 = vsel %vm296, %v304, 0.0
    %393 = vadd.xlane.f32.xlu0 %v385
    %v394 = vpop.xlane.xlu0 %393
    %395 = vadd.xlane.f32.xlu0 %v386
    %v396 = vpop.xlane.xlu0 %395
    %397 = vadd.xlane.f32.xlu0 %v387
    %v398 = vpop.xlane.xlu0 %397
    %399 = vadd.xlane.f32.xlu0 %v388
    %v400 = vpop.xlane.xlu0 %399
    %401 = vadd.xlane.f32.xlu0 %v389
    %v402 = vpop.xlane.xlu0 %401
    %403 = vadd.xlane.f32.xlu0 %v390
    %v404 = vpop.xlane.xlu0 %403
    %405 = vadd.xlane.f32.xlu0 %v391
    %v406 = vpop.xlane.xlu0 %405
    %407 = vadd.xlane.f32.xlu0 %v392
    %v408 = vpop.xlane.xlu0 %407
    %v409 = vsub.f32 %v377, %v394
    %v410 = vsub.f32 %v378, %v396
    %v411 = vsub.f32 %v379, %v398
    %v412 = vsub.f32 %v380, %v400
    %v413 = vsub.f32 %v381, %v402
    %v414 = vsub.f32 %v382, %v404
    %v415 = vsub.f32 %v383, %v406
    %v416 = vsub.f32 %v384, %v408
    %v417 = vmul.f32 %v409, 1.6666666
    %v418 = vmul.f32 %v410, 1.6666666
    %v419 = vmul.f32 %v411, 1.6666666
    %v420 = vmul.f32 %v412, 1.6666666
    %v421 = vmul.f32 %v413, 1.6666666
    %v422 = vmul.f32 %v414, 1.6666666
    %v423 = vmul.f32 %v415, 1.6666666
    %v424 = vmul.f32 %v416, 1.6666666
    %v425 = vsub.f32 %v88, 30.0
    %v426 = vsub.f32 %v89, 30.0
    %v427 = vsub.f32 %v90, 30.0
    %v428 = vsub.f32 %v91, 30.0
    %v429 = vsub.f32 %v92, 30.0
    %v430 = vsub.f32 %v93, 30.0
    %v431 = vsub.f32 %v94, 30.0
    %v432 = vsub.f32 %v95, 30.0
    %v433 = vand.u32 2147483647, %v425
    %v434 = vand.u32 2147483647, %v426
    %v435 = vand.u32 2147483647, %v427
    %v436 = vand.u32 2147483647, %v428
    %v437 = vand.u32 2147483647, %v429
    %v438 = vand.u32 2147483647, %v430
    %v439 = vand.u32 2147483647, %v431
    %v440 = vand.u32 2147483647, %v432
    %v441 = vmul.f32 %v433, 0.01
    %v442 = vmul.f32 %v434, 0.01
    %v443 = vmul.f32 %v435, 0.01
    %v444 = vmul.f32 %v436, 0.01
    %v445 = vmul.f32 %v437, 0.01
    %v446 = vmul.f32 %v438, 0.01
    %v447 = vmul.f32 %v439, 0.01
    %v448 = vmul.f32 %v440, 0.01
    %v449 = vadd.f32 %v417, %v441
    %v450 = vadd.f32 %v418, %v442
    %v451 = vadd.f32 %v419, %v443
    %v452 = vadd.f32 %v420, %v444
    %v453 = vadd.f32 %v421, %v445
    %v454 = vadd.f32 %v422, %v446
    %v455 = vadd.f32 %v423, %v447
    %v456 = vadd.f32 %v424, %v448
    %v457 = vadd.f32 %v449, %v450
    %v458 = vadd.f32 %v457, %v451
    %v459 = vadd.f32 %v458, %v452
    %v460 = vadd.f32 %v459, %v453
    %v461 = vadd.f32 %v460, %v454
    %v462 = vadd.f32 %v461, %v455
    %v463 = vadd.f32 %v462, %v456
    %v464 = vrot.slane %v463, 4
    %v465 = vadd.f32 %v463, %v464
    %v466 = vrot.slane %v465, 2
    %v467 = vadd.f32 %v465, %v466
    %v468 = vrot.slane %v467, 1
    %v469 = vadd.f32 %v467, %v468
    %vm470 = vcmask 0
    %471 = vst.msk [vmem:[#allocation2] sm:$0x1] %vm470, %v469
    // Predicated region
    $region18: #{_lambda_.1} parent=1 // pred_check
      _
    $region19: #{_lambda_.1} parent=1 // pred_check_branch
      %473 = sbr.rel (0) target = $region21
    $region20: #{_lambda_.1} parent=1 // pred_region
      %s475 = ssub.s32 16, 16
      %476 = vsyncadd [#allocation3], %s475
      %s478 = sshll.u32 [#allocation2], 4
      %s479 = int_to_ptr.vmem [resolvable:$true] %s478
      %481 = dma.vmem_to_hbm [thread:$0]  %s479, 16, %s4, [#allocation3]
    $region21: #{_lambda_.1} parent=1 // pred_fallthru
      _
    // Predicated region
    $region22: #{_lambda_.1} parent=1 // pred_check
      _
    $region23: #{_lambda_.1} parent=1 // pred_check_branch
      %483 = sbr.rel (0) target = $region25
    $region24: #{_lambda_.1} parent=1 // pred_region
      %484 = dma.done [#allocation3], 16
    $region25: #{_lambda_.1} parent=1 // pred_fallthru
      _
    %485 = vsyncpa [#allocation3], 1

</llo_original>
